<compile_context>
chip_gen: v7x
topology: tpu7x:2x2x1
jax: 0.10.0
libtpu: 0.0.40
codegen_flags: <defaults>
</compile_context>

<pallas_src>
import functools

import jax
import jax.numpy as jnp
from jax import lax
from jax.experimental import pallas as pl
from jax.experimental.pallas import tpu as pltpu

_LANE_CANDIDATES = (4096, 2048, 1024, 512, 256, 128)
_TARGET_BLOCK_ELEMS = 512 * 1024  # ~2 MiB per f32 operand tile
_VMEM_LIMIT_BYTES = 32 << 20      # safe on v5e/v6e/v7x; gives pipeline headroom


def _focal_math(x, t, pos_weight, gamma):
    """Elementwise focal loss in f32 (numerically-stable BCE-with-logits)."""
    # bce = max(x,0) - x*t + log1p(exp(-|x|))  (== F.binary_cross_entropy_with_logits)
    bce = jnp.maximum(x, 0.0) - x * t + jnp.log1p(jnp.exp(-jnp.abs(x)))
    p_t = jnp.exp(-bce)
    alpha = (1.0 - pos_weight) + t * (2.0 * pos_weight - 1.0)
    q = 1.0 - p_t
    g = float(gamma)
    if g == 0.0:
        mod = jnp.ones_like(q)
    elif g.is_integer() and 0.0 < g <= 4.0:
        # Integer gamma (default 2.0): repeated multiply instead of pow
        # (avoids exp(g*log(q)) -> 2 extra EUP transcendentals per element).
        mod = q
        for _ in range(int(g) - 1):
            mod = mod * q
    else:
        mod = q ** g
    return alpha * mod * bce


def _focal_loss_kernel(x_ref, t_ref, o_ref, *, pos_weight, gamma):
    x = x_ref[...].astype(jnp.float32)
    t = t_ref[...].astype(jnp.float32)
    f = _focal_math(x, t, pos_weight, gamma)
    o_ref[...] = f.astype(o_ref.dtype)


def _focal_loss_sum_kernel(x_ref, t_ref, o_ref, acc_ref, *, pos_weight, gamma,
                           n_valid, lanes, block_rows, needs_mask, scale):
    i = pl.program_id(0)

    @pl.when(i == 0)
    def _():
        acc_ref[...] = jnp.zeros_like(acc_ref)

    x = x_ref[...].astype(jnp.float32)
    t = t_ref[...].astype(jnp.float32)
    f = _focal_math(x, t, pos_weight, gamma)

    if needs_mask:
        # Zero out padded / ragged-tail elements so they don't pollute the sum.
        r = lax.broadcasted_iota(jnp.int32, f.shape, 0)
        c = lax.broadcasted_iota(jnp.int32, f.shape, 1)
        flat = (i * block_rows + r) * lanes + c
        f = jnp.where(flat < n_valid, f, 0.0)

    # Per-lane partial sums (VPU accumulate); single XLU cross-lane reduce at the end.
    acc_ref[...] += jnp.sum(f, axis=0, keepdims=True)

    @pl.when(i == pl.num_programs(0) - 1)
    def _():
        total = jnp.sum(acc_ref[...], keepdims=True) * scale  # scale folds 1/N for 'mean'
        o_ref[...] = total.astype(o_ref.dtype)


def _slab_config(n):
    """Pick a lane-dense factorization of n that avoids padding when possible."""
    for lanes in _LANE_CANDIDATES:
        if n % lanes == 0:
            return lanes, 0
    lanes = 128
    return lanes, (-n) % lanes


def focal_loss(inputs, targets, *, pos_weight=0.5, gamma=2.0, reduction="none"):
    assert inputs.shape == targets.shape
    orig_shape = inputs.shape
    n = int(inputs.size)
    out_dtype = inputs.dtype if jnp.issubdtype(inputs.dtype, jnp.floating) else jnp.float32

    lanes, pad = _slab_config(n)
    x_flat = inputs.reshape(-1)
    t_flat = targets.reshape(-1)
    if pad:
        # Rare fallback (n not a multiple of 128): minimal pad to 128 lanes.
        x_flat = jnp.pad(x_flat, (0, pad))
        t_flat = jnp.pad(t_flat, (0, pad))
    rows = (n + pad) // lanes
    x2 = x_flat.reshape(rows, lanes)
    t2 = t_flat.reshape(rows, lanes)

    # ~2 MiB (f32) per operand tile; block sublane dim multiple of 8 or full.
    target_rows = max(1, _TARGET_BLOCK_ELEMS // lanes)
    if rows <= target_rows:
        block_rows = rows
    else:
        block_rows = max(8, (target_rows // 8) * 8)
    grid = (pl.cdiv(rows, block_rows),)

    spec = pl.BlockSpec((block_rows, lanes), lambda i: (i, 0))

    if reduction == "none":
        kernel = functools.partial(
            _focal_loss_kernel, pos_weight=float(pos_weight), gamma=float(gamma)
        )
        out2 = pl.pallas_call(
            kernel,
            out_shape=jax.ShapeDtypeStruct((rows, lanes), out_dtype),
            grid=grid,
            in_specs=[spec, spec],
            out_specs=spec,
            compiler_params=pltpu.CompilerParams(
                dimension_semantics=("parallel",),
                vmem_limit_bytes=_VMEM_LIMIT_BYTES,
            ),
        )(x2, t2)
        flat_out = out2.reshape(-1)
        if pad:
            flat_out = flat_out[:n]
        return flat_out.reshape(orig_shape)

    elif reduction in ("mean", "sum"):
        needs_mask = (pad > 0) or (rows % block_rows != 0)
        scale = (1.0 / n) if reduction == "mean" else 1.0
        kernel = functools.partial(
            _focal_loss_sum_kernel,
            pos_weight=float(pos_weight), gamma=float(gamma),
            n_valid=n, lanes=lanes, block_rows=block_rows,
            needs_mask=needs_mask, scale=scale,
        )
        out = pl.pallas_call(
            kernel,
            out_shape=jax.ShapeDtypeStruct((1, 1), out_dtype),
            grid=grid,
            in_specs=[spec, spec],
            out_specs=pl.BlockSpec((1, 1), lambda i: (0, 0)),
            scratch_shapes=[pltpu.VMEM((1, lanes), jnp.float32)],
            compiler_params=pltpu.CompilerParams(
                dimension_semantics=("arbitrary",),
                vmem_limit_bytes=_VMEM_LIMIT_BYTES,
            ),
        )(x2, t2)
        return out[0, 0]

    else:
        raise ValueError(f"unknown reduction: {reduction}")


def _focal_loss_ref(inputs, targets, pos_weight=0.5, gamma=2.0):
    x = inputs.astype(jnp.float32)
    t = targets.astype(jnp.float32)
    bce = jnp.maximum(x, 0.0) - x * t + jnp.log1p(jnp.exp(-jnp.abs(x)))
    p_t = jnp.exp(-bce)
    alpha = (1.0 - pos_weight) + t * (2.0 * pos_weight - 1.0)
    return alpha * (1.0 - p_t) ** gamma * bce


if __name__ == "__main__":
    key = jax.random.PRNGKey(0)
    k1, k2, k3, k4 = jax.random.split(key, 4)

    # Small NCHW shapes, consistent with a segmentation-style logit map.
    B, C, H, W = 2, 4, 16, 16
    logits = jax.random.normal(k1, (B, C, H, W), dtype=jnp.float32)
    targets = jax.random.bernoulli(k2, p=0.3, shape=(B, C, H, W)).astype(jnp.float32)

    out = jax.block_until_ready(
        focal_loss(logits, targets, pos_weight=0.5, gamma=2.0, reduction="none")
    )
    ref = _focal_loss_ref(logits, targets)
    assert out.shape == (B, C, H, W)
    assert jnp.allclose(out, ref, atol=1e-5, rtol=1e-5)

    out_mean = jax.block_until_ready(
        focal_loss(logits, targets, pos_weight=0.5, gamma=2.0, reduction="mean")
    )
    assert jnp.allclose(out_mean, ref.mean(), atol=1e-5, rtol=1e-5)

    out_sum = jax.block_until_ready(
        focal_loss(logits, targets, pos_weight=0.5, gamma=2.0, reduction="sum")
    )
    assert jnp.allclose(out_sum, ref.sum(), atol=1e-4, rtol=1e-5)

    # Irregular shape: exercises the padded fallback + in-kernel tail masking.
    x_odd = jax.random.normal(k3, (3, 5, 7, 11), dtype=jnp.float32)
    t_odd = jax.random.bernoulli(k4, p=0.5, shape=(3, 5, 7, 11)).astype(jnp.float32)
    out_odd = jax.block_until_ready(focal_loss(x_odd, t_odd, reduction="none"))
    ref_odd = _focal_loss_ref(x_odd, t_odd)
    assert jnp.allclose(out_odd, ref_odd, atol=1e-5, rtol=1e-5)
    out_odd_sum = jax.block_until_ready(focal_loss(x_odd, t_odd, reduction="sum"))
    assert jnp.allclose(out_odd_sum, ref_odd.sum(), atol=1e-4, rtol=1e-5)

    # Non-default gamma: exercises the general pow path.
    out_g = jax.block_until_ready(
        focal_loss(logits, targets, pos_weight=0.25, gamma=1.5, reduction="mean")
    )
    assert jnp.allclose(out_g, _focal_loss_ref(logits, targets, 0.25, 1.5).mean(),
                        atol=1e-5, rtol=1e-5)

    print("KERNEL_OK")
</pallas_src>

<mosaic_0001>
module attributes {stable_mosaic.version = 11 : i64} {
  func.func @_focal_loss_kernel(%arg0: i32, %arg1: memref<1x2048xf32, #tpu.memory_space<vmem>>, %arg2: memref<1x2048xf32, #tpu.memory_space<vmem>>, %arg3: memref<1x2048xf32, #tpu.memory_space<vmem>>) attributes {dimension_semantics = [#tpu.dimension_semantics<parallel>], iteration_bounds = array<i64: 1>, scalar_prefetch = 0 : i64, scratch_operands = 0 : i64, tpu.core_type = #tpu.core_type<tc>, window_params = [{transform_indices = @transform_0, window_bounds = array<i64: 1, 2048>}, {transform_indices = @transform_1, window_bounds = array<i64: 1, 2048>}, {transform_indices = @transform_2, window_bounds = array<i64: 1, 2048>}]} {
    %c0 = arith.constant 0 : index
    %c0_0 = arith.constant 0 : index
    %0 = vector.load %arg1[%c0, %c0_0] : memref<1x2048xf32, #tpu.memory_space<vmem>>, vector<1x2048xf32>
    %c0_1 = arith.constant 0 : index
    %c0_2 = arith.constant 0 : index
    %1 = vector.load %arg2[%c0_1, %c0_2] : memref<1x2048xf32, #tpu.memory_space<vmem>>, vector<1x2048xf32>
    %cst = arith.constant 0.000000e+00 : f32
    %2 = vector.broadcast %cst : f32 to vector<1x2048xf32>
    %3 = arith.maximumf %0, %2 : vector<1x2048xf32>
    %4 = arith.mulf %0, %1 : vector<1x2048xf32>
    %5 = arith.subf %3, %4 : vector<1x2048xf32>
    %6 = math.absf %0 : vector<1x2048xf32>
    %cst_3 = arith.constant 0.000000e+00 : f32
    %7 = vector.broadcast %cst_3 : f32 to vector<1x2048xf32>
    %8 = arith.subf %7, %6 : vector<1x2048xf32>
    %9 = math.exp %8 : vector<1x2048xf32>
    %10 = math.log1p %9 : vector<1x2048xf32>
    %11 = arith.addf %5, %10 : vector<1x2048xf32>
    %cst_4 = arith.constant 0.000000e+00 : f32
    %12 = vector.broadcast %cst_4 : f32 to vector<1x2048xf32>
    %13 = arith.subf %12, %11 : vector<1x2048xf32>
    %14 = math.exp %13 : vector<1x2048xf32>
    %cst_5 = arith.constant 0.000000e+00 : f32
    %15 = vector.broadcast %cst_5 : f32 to vector<1x2048xf32>
    %16 = arith.mulf %1, %15 : vector<1x2048xf32>
    %cst_6 = arith.constant 5.000000e-01 : f32
    %17 = vector.broadcast %cst_6 : f32 to vector<1x2048xf32>
    %18 = arith.addf %17, %16 : vector<1x2048xf32>
    %cst_7 = arith.constant 1.000000e+00 : f32
    %19 = vector.broadcast %cst_7 : f32 to vector<1x2048xf32>
    %20 = arith.subf %19, %14 : vector<1x2048xf32>
    %21 = arith.mulf %20, %20 : vector<1x2048xf32>
    %22 = arith.mulf %18, %21 : vector<1x2048xf32>
    %23 = arith.mulf %22, %11 : vector<1x2048xf32>
    %c0_8 = arith.constant 0 : index
    %c0_9 = arith.constant 0 : index
    %24 = vector.load %arg3[%c0_8, %c0_9] : memref<1x2048xf32, #tpu.memory_space<vmem>>, vector<1x2048xf32>
    tpu.vector_store %arg3[%c0_8, %c0_9], %23 {strides = array<i32>} : memref<1x2048xf32, #tpu.memory_space<vmem>>, vector<1x2048xf32>,
    return
  }
  func.func @transform_0(%arg0: i32) -> (i32, i32) {
    %c0_i32 = arith.constant 0 : i32
    %c0_i32_0 = arith.constant 0 : i32
    return %arg0, %c0_i32 : i32, i32
  }
  func.func @transform_1(%arg0: i32) -> (i32, i32) {
    %c0_i32 = arith.constant 0 : i32
    %c0_i32_0 = arith.constant 0 : i32
    return %arg0, %c0_i32 : i32, i32
  }
  func.func @transform_2(%arg0: i32) -> (i32, i32) {
    %c0_i32 = arith.constant 0 : i32
    %c0_i32_0 = arith.constant 0 : i32
    return %arg0, %c0_i32 : i32, i32
  }
}

</mosaic_0001>

<llo_original>
// kernel: tpu_custom_call.1
$region0: #{tpu_custom_call.1}
  #allocation0 [shape = 'u32[]', space=smem, size = 0x4, offset = 0x4, fixed_abs, tag = 'smem constant byte address 0x4 - core index']
  #allocation1 [shape = 'u32[144,128]{1,0:T(1,128)}', space=vmem, size = 0x12000, scoped, tag = 'internal scratch']
  %s0 = inlined_call_operand.hbm [shape: f32[1,2048], index: 0, kind: input, shape index: {}]
  %s1 = inlined_call_operand.hbm [shape: f32[1,2048], index: 1, kind: input, shape index: {}]
  %s2 = inlined_call_operand.hbm [shape: f32[1,2048], index: 2, kind: output, shape index: {}]
  %s3 = sld [smem:[#allocation0]]
  $region26: #{tpu_custom_call.1} parent=0
    _
  %s5 = ssub.s32 1, %s3
  %s6 = scalar_select 0, %s5, %s3
  $region1: #{tpu_custom_call.1} parent=0
    #allocation2 [shape = 'u8[8192]{0}', space=vmem, size = 0x2000, scoped, tag = 'input window, operand 0, single buffered']
    #allocation3 [shape = 's32[1]{0}', space=sflag, size = 0x4, scoped, tag = 'scoped memory for tpu_custom_call.1']
    #allocation4 [shape = 's32[1]{0}', space=sflag, size = 0x4, scoped, tag = 'scoped memory for tpu_custom_call.1']
    #allocation5 [shape = 'u8[8192]{0}', space=vmem, size = 0x2000, scoped, tag = 'input window, operand 1, single buffered']
    #allocation6 [shape = 's32[1]{0}', space=sflag, size = 0x4, scoped, tag = 'scoped memory for tpu_custom_call.1']
    #allocation7 [shape = 'u8[8192]{0}', space=vmem, size = 0x2000, scoped, tag = 'output window, operand 0, single buffered']
    %7 = vsyncpa [#allocation3], 0
    %8 = vsyncpa [#allocation6], 0
    %9 = vsyncpa [#allocation4], 0
    // Predicated region
    $region2: #{tpu_custom_call.1} parent=1 // pred_check
      _
    $region3: #{tpu_custom_call.1} parent=1 // pred_check_branch
      %11 = sbr.rel (0) target = $region5
    $region4: #{tpu_custom_call.1} parent=1 // pred_region
      %s13 = ssub.s32 256, 256
      %14 = vsyncadd [#allocation3], %s13
      %s16 = sshll.u32 [#allocation2], 4
      %s17 = int_to_ptr.vmem [resolvable:$true] %s16
      %19 = dma.hbm_to_vmem [thread:$0]  %s0, 256, %s17, [#allocation3]
    $region5: #{tpu_custom_call.1} parent=1 // pred_fallthru
      _
    // Predicated region
    $region6: #{tpu_custom_call.1} parent=1 // pred_check
      _
    $region7: #{tpu_custom_call.1} parent=1 // pred_check_branch
      %21 = sbr.rel (0) target = $region9
    $region8: #{tpu_custom_call.1} parent=1 // pred_region
      %s23 = ssub.s32 256, 256
      %24 = vsyncadd [#allocation6], %s23
      %s26 = sshll.u32 [#allocation5], 4
      %s27 = int_to_ptr.vmem [resolvable:$true] %s26
      %29 = dma.hbm_to_vmem [thread:$0]  %s1, 256, %s27, [#allocation6]
    $region9: #{tpu_custom_call.1} parent=1 // pred_fallthru
      _
    // Predicated region
    $region10: #{tpu_custom_call.1} parent=1 // pred_check
      _
    $region11: #{tpu_custom_call.1} parent=1 // pred_check_branch
      %31 = sbr.rel (0) target = $region13
    $region12: #{tpu_custom_call.1} parent=1 // pred_region
      %32 = dma.done [#allocation3], 256
    $region13: #{tpu_custom_call.1} parent=1 // pred_fallthru
      _
    // Predicated region
    $region14: #{tpu_custom_call.1} parent=1 // pred_check
      _
    $region15: #{tpu_custom_call.1} parent=1 // pred_check_branch
      %34 = sbr.rel (0) target = $region17
    $region16: #{tpu_custom_call.1} parent=1 // pred_region
      %35 = dma.done [#allocation6], 256
    $region17: #{tpu_custom_call.1} parent=1 // pred_fallthru
      _
    %v36 = vld [vmem:[#allocation2] sm:$0xff]
    %v37 = vld [vmem:[#allocation2 + $0x8] sm:$0xff]
    %v38 = vld [vmem:[#allocation5] sm:$0xff]
    %v39 = vld [vmem:[#allocation5 + $0x8] sm:$0xff]
    %v40 = vmax.f32 %v36, 0.0
    %v41 = vmax.f32 %v37, 0.0
    %v42 = vmul.f32 %v36, %v38
    %v43 = vmul.f32 %v37, %v39
    %v44 = vsub.f32 %v40, %v42
    %v45 = vsub.f32 %v41, %v43
    %v46 = vand.u32 2147483647, %v36
    %v47 = vand.u32 2147483647, %v37
    %v48 = vsub.f32 0.0, %v46
    %v49 = vsub.f32 0.0, %v47
    %v50 = vmul.f32 %v48, 1.442695
    %v51 = vpow.pop %v50
    %v52 = vmul.f32 %v49, 1.442695
    %v53 = vpow.pop %v52
    %v54 = vadd.f32 %v51, 1.0
    %v55 = vlog2.pop %v54
    %v56 = vmul.f32 %v55, 0.6931472
    %v57 = vmul.f32 -0.5, %v51
    %v58 = vadd.f32 %v57, 1.0
    %v59 = vmul.f32 %v58, %v51
    %v60 = vand.u32 2147483647, %v51
    %vm61 = vcmp.lt.f32.partialorder %v60, 0.0004427343
    %v62 = vsel %vm61, %v59, %v56
    %v63 = vadd.f32 %v53, 1.0
    %v64 = vlog2.pop %v63
    %v65 = vmul.f32 %v64, 0.6931472
    %v66 = vmul.f32 -0.5, %v53
    %v67 = vadd.f32 %v66, 1.0
    %v68 = vmul.f32 %v67, %v53
    %v69 = vand.u32 2147483647, %v53
    %vm70 = vcmp.lt.f32.partialorder %v69, 0.0004427343
    %v71 = vsel %vm70, %v68, %v65
    %v72 = vadd.f32 %v44, %v62
    %v73 = vadd.f32 %v45, %v71
    %v74 = vsub.f32 0.0, %v72
    %v75 = vsub.f32 0.0, %v73
    %v76 = vmul.f32 %v74, 1.442695
    %v77 = vpow.pop %v76
    %v78 = vmul.f32 %v75, 1.442695
    %v79 = vpow.pop %v78
    %v80 = vmul.f32 %v38, 0.0
    %v81 = vmul.f32 %v39, 0.0
    %v82 = vadd.f32 %v80, 0.5
    %v83 = vadd.f32 %v81, 0.5
    %v84 = vsub.f32 1.0, %v77
    %v85 = vsub.f32 1.0, %v79
    %v86 = vmul.f32 %v84, %v84
    %v87 = vmul.f32 %v85, %v85
    %v88 = vmul.f32 %v82, %v86
    %v89 = vmul.f32 %v83, %v87
    %v90 = vmul.f32 %v88, %v72
    %v91 = vmul.f32 %v89, %v73
    %92 = vst [vmem:[#allocation7] sm:$0xff] %v90
    %93 = vst [vmem:[#allocation7 + $0x8] sm:$0xff] %v91
    // Predicated region
    $region18: #{tpu_custom_call.1} parent=1 // pred_check
      _
    $region19: #{tpu_custom_call.1} parent=1 // pred_check_branch
      %95 = sbr.rel (0) target = $region21
    $region20: #{tpu_custom_call.1} parent=1 // pred_region
      %s97 = ssub.s32 256, 256
      %98 = vsyncadd [#allocation4], %s97
      %s100 = sshll.u32 [#allocation7], 4
      %s101 = int_to_ptr.vmem [resolvable:$true] %s100
      %103 = dma.vmem_to_hbm [thread:$0]  %s101, 256, %s2, [#allocation4]
    $region21: #{tpu_custom_call.1} parent=1 // pred_fallthru
      _
    // Predicated region
    $region22: #{tpu_custom_call.1} parent=1 // pred_check
      _
    $region23: #{tpu_custom_call.1} parent=1 // pred_check_branch
      %105 = sbr.rel (0) target = $region25
    $region24: #{tpu_custom_call.1} parent=1 // pred_region
      %106 = dma.done [#allocation4], 256
    $region25: #{tpu_custom_call.1} parent=1 // pred_fallthru
      _
    %107 = vsyncpa [#allocation3], 1
    %108 = vsyncpa [#allocation6], 1
    %109 = vsyncpa [#allocation4], 1

</llo_original>
